<compile_context>
chip_gen: v7x
topology: tpu7x:2x2x1
jax: 0.10.0
libtpu: 0.0.40
codegen_flags: <defaults>
</compile_context>

<pallas_src>
import jax
import jax.numpy as jnp
from jax.experimental import pallas as pl
from jax.experimental.pallas import tpu as pltpu

INPUT_SIZE = 8
HIDDEN_SIZE = 3
OUTPUT_SIZE = 1
TILE_B = 512  # batch lanes per grid step (multiple of 128)


def fused_linear_kernel(w_ref, b_ref, xT_ref, o_ref):
    """w_ref: SMEM [8] f32, b_ref: SMEM [1] f32,
    xT_ref: VMEM [8, TILE_B] (features on sublanes, batch on lanes),
    o_ref : VMEM [1, TILE_B] (lane-dense output)."""
    # Unrolled 8-step multiply-add on the VPU, all f32.
    acc = xT_ref[0:1, :] * w_ref[0]
    for k in range(1, INPUT_SIZE):
        acc = acc + xT_ref[k:k + 1, :] * w_ref[k]
    o_ref[...] = acc + b_ref[0]


def simple_nn_forward(x, w1, b1, w2, b2):
    """x: [B, 8] f32. w1: [hidden, in] (PyTorch layout), b1: [hidden],
    w2: [out, hidden], b2: [out]. Returns [B, out] f32."""
    B = x.shape[0]

    # --- Exact algebraic fusion of the two linear layers (no activation) ---
    w_eff = (jnp.transpose(w1) @ jnp.transpose(w2)).reshape(INPUT_SIZE)  # [8]
    b_eff = (b1 @ jnp.transpose(w2) + b2).reshape(OUTPUT_SIZE)           # [1]

    # --- Lane-dense layout: batch on lanes, features on sublanes ---
    xT = jnp.transpose(x)                                  # [8, B]
    Bp = pl.cdiv(B, TILE_B) * TILE_B
    if Bp != B:
        xT = jnp.pad(xT, ((0, 0), (0, Bp - B)))            # [8, Bp]

    num_tiles = Bp // TILE_B
    smem_spec = pl.BlockSpec(memory_space=pltpu.MemorySpace.SMEM)

    out_flat = pl.pallas_call(
        fused_linear_kernel,
        out_shape=jax.ShapeDtypeStruct((1, Bp), jnp.float32),
        grid=(num_tiles,),
        in_specs=[
            smem_spec,                                                  # w_eff
            smem_spec,                                                  # b_eff
            pl.BlockSpec((INPUT_SIZE, TILE_B), lambda i: (0, i)),       # xT
        ],
        out_specs=pl.BlockSpec((1, TILE_B), lambda i: (0, i)),
        compiler_params=pltpu.CompilerParams(
            dimension_semantics=("parallel",),
            vmem_limit_bytes=32 * 1024 * 1024,
        ),
    )(w_eff, b_eff, xT)

    # Strip batch padding, restore PyTorch's [B, output_size] shape.
    return out_flat[0, :B].reshape(B, OUTPUT_SIZE)


def init_params(key):
    """Deterministic init matching PyTorch nn.Linear default:
    U(-1/sqrt(fan_in), 1/sqrt(fan_in)) for both weight and bias."""
    k1, k2, k3, k4 = jax.random.split(key, 4)
    bound1 = 1.0 / jnp.sqrt(INPUT_SIZE)
    bound2 = 1.0 / jnp.sqrt(HIDDEN_SIZE)
    w1 = jax.random.uniform(k1, (HIDDEN_SIZE, INPUT_SIZE), jnp.float32,
                            -bound1, bound1)
    b1 = jax.random.uniform(k2, (HIDDEN_SIZE,), jnp.float32, -bound1, bound1)
    w2 = jax.random.uniform(k3, (OUTPUT_SIZE, HIDDEN_SIZE), jnp.float32,
                            -bound2, bound2)
    b2 = jax.random.uniform(k4, (OUTPUT_SIZE,), jnp.float32, -bound2, bound2)
    return w1, b1, w2, b2


if __name__ == "__main__":
    key = jax.random.PRNGKey(0)
    k_param, k_x = jax.random.split(key)

    w1, b1, w2, b2 = init_params(k_param)

    # Non-multiple-of-TILE_B batch to exercise padding + the 1-D batch grid.
    batch = 1000
    x = jax.random.normal(k_x, (batch, INPUT_SIZE), jnp.float32)

    out = simple_nn_forward(x, w1, b1, w2, b2)
    out = jax.block_until_ready(out)

    # Pure-JAX reference (same semantics as PyTorch SimpleNN.forward).
    ref = (x @ w1.T + b1) @ w2.T + b2
    assert out.shape == (batch, OUTPUT_SIZE)
    assert jnp.allclose(out, ref, atol=1e-5, rtol=1e-5)

    print("KERNEL_OK")
</pallas_src>

<mosaic_0001>
module attributes {stable_mosaic.version = 11 : i64} {
  func.func @fused_linear_kernel(%arg0: i32, %arg1: memref<8xf32, #tpu.memory_space<smem>>, %arg2: memref<1xf32, #tpu.memory_space<smem>>, %arg3: memref<8x512xf32, #tpu.memory_space<vmem>>, %arg4: memref<1x512xf32, #tpu.memory_space<vmem>>) attributes {dimension_semantics = [#tpu.dimension_semantics<parallel>], iteration_bounds = array<i64: 2>, scalar_prefetch = 0 : i64, scratch_operands = 0 : i64, tpu.core_type = #tpu.core_type<tc>, window_params = [{transform_indices = @transform_0, window_bounds = array<i64: 8>}, {transform_indices = @transform_1, window_bounds = array<i64: 1>}, {transform_indices = @transform_2, window_bounds = array<i64: 8, 512>}, {transform_indices = @transform_3, window_bounds = array<i64: 1, 512>}]} {
    %c0 = arith.constant 0 : index
    %c0_0 = arith.constant 0 : index
    %0 = vector.load %arg3[%c0, %c0_0] : memref<8x512xf32, #tpu.memory_space<vmem>>, vector<1x512xf32>
    %c0_1 = arith.constant 0 : index
    %1 = memref.load %arg1[%c0_1] : memref<8xf32, #tpu.memory_space<smem>>
    %2 = vector.broadcast %1 : f32 to vector<1x512xf32>
    %3 = arith.mulf %0, %2 : vector<1x512xf32>
    %c1 = arith.constant 1 : index
    %c0_2 = arith.constant 0 : index
    %4 = vector.load %arg3[%c1, %c0_2] : memref<8x512xf32, #tpu.memory_space<vmem>>, vector<1x512xf32>
    %c1_3 = arith.constant 1 : index
    %5 = memref.load %arg1[%c1_3] : memref<8xf32, #tpu.memory_space<smem>>
    %6 = vector.broadcast %5 : f32 to vector<1x512xf32>
    %7 = arith.mulf %4, %6 : vector<1x512xf32>
    %8 = arith.addf %3, %7 : vector<1x512xf32>
    %c2 = arith.constant 2 : index
    %c0_4 = arith.constant 0 : index
    %9 = vector.load %arg3[%c2, %c0_4] : memref<8x512xf32, #tpu.memory_space<vmem>>, vector<1x512xf32>
    %c2_5 = arith.constant 2 : index
    %10 = memref.load %arg1[%c2_5] : memref<8xf32, #tpu.memory_space<smem>>
    %11 = vector.broadcast %10 : f32 to vector<1x512xf32>
    %12 = arith.mulf %9, %11 : vector<1x512xf32>
    %13 = arith.addf %8, %12 : vector<1x512xf32>
    %c3 = arith.constant 3 : index
    %c0_6 = arith.constant 0 : index
    %14 = vector.load %arg3[%c3, %c0_6] : memref<8x512xf32, #tpu.memory_space<vmem>>, vector<1x512xf32>
    %c3_7 = arith.constant 3 : index
    %15 = memref.load %arg1[%c3_7] : memref<8xf32, #tpu.memory_space<smem>>
    %16 = vector.broadcast %15 : f32 to vector<1x512xf32>
    %17 = arith.mulf %14, %16 : vector<1x512xf32>
    %18 = arith.addf %13, %17 : vector<1x512xf32>
    %c4 = arith.constant 4 : index
    %c0_8 = arith.constant 0 : index
    %19 = vector.load %arg3[%c4, %c0_8] : memref<8x512xf32, #tpu.memory_space<vmem>>, vector<1x512xf32>
    %c4_9 = arith.constant 4 : index
    %20 = memref.load %arg1[%c4_9] : memref<8xf32, #tpu.memory_space<smem>>
    %21 = vector.broadcast %20 : f32 to vector<1x512xf32>
    %22 = arith.mulf %19, %21 : vector<1x512xf32>
    %23 = arith.addf %18, %22 : vector<1x512xf32>
    %c5 = arith.constant 5 : index
    %c0_10 = arith.constant 0 : index
    %24 = vector.load %arg3[%c5, %c0_10] : memref<8x512xf32, #tpu.memory_space<vmem>>, vector<1x512xf32>
    %c5_11 = arith.constant 5 : index
    %25 = memref.load %arg1[%c5_11] : memref<8xf32, #tpu.memory_space<smem>>
    %26 = vector.broadcast %25 : f32 to vector<1x512xf32>
    %27 = arith.mulf %24, %26 : vector<1x512xf32>
    %28 = arith.addf %23, %27 : vector<1x512xf32>
    %c6 = arith.constant 6 : index
    %c0_12 = arith.constant 0 : index
    %29 = vector.load %arg3[%c6, %c0_12] : memref<8x512xf32, #tpu.memory_space<vmem>>, vector<1x512xf32>
    %c6_13 = arith.constant 6 : index
    %30 = memref.load %arg1[%c6_13] : memref<8xf32, #tpu.memory_space<smem>>
    %31 = vector.broadcast %30 : f32 to vector<1x512xf32>
    %32 = arith.mulf %29, %31 : vector<1x512xf32>
    %33 = arith.addf %28, %32 : vector<1x512xf32>
    %c7 = arith.constant 7 : index
    %c0_14 = arith.constant 0 : index
    %34 = vector.load %arg3[%c7, %c0_14] : memref<8x512xf32, #tpu.memory_space<vmem>>, vector<1x512xf32>
    %c7_15 = arith.constant 7 : index
    %35 = memref.load %arg1[%c7_15] : memref<8xf32, #tpu.memory_space<smem>>
    %36 = vector.broadcast %35 : f32 to vector<1x512xf32>
    %37 = arith.mulf %34, %36 : vector<1x512xf32>
    %38 = arith.addf %33, %37 : vector<1x512xf32>
    %c0_16 = arith.constant 0 : index
    %39 = memref.load %arg2[%c0_16] : memref<1xf32, #tpu.memory_space<smem>>
    %40 = vector.broadcast %39 : f32 to vector<1x512xf32>
    %41 = arith.addf %38, %40 : vector<1x512xf32>
    %c0_17 = arith.constant 0 : index
    %c0_18 = arith.constant 0 : index
    %42 = vector.load %arg4[%c0_17, %c0_18] : memref<1x512xf32, #tpu.memory_space<vmem>>, vector<1x512xf32>
    tpu.vector_store %arg4[%c0_17, %c0_18], %41 {strides = array<i32>} : memref<1x512xf32, #tpu.memory_space<vmem>>, vector<1x512xf32>,
    return
  }
  func.func @transform_0(%arg0: i32) -> i32 {
    %c0_i32 = arith.constant 0 : i32
    %c0_i32_0 = arith.constant 0 : i32
    return %c0_i32 : i32
  }
  func.func @transform_1(%arg0: i32) -> i32 {
    %c0_i32 = arith.constant 0 : i32
    %c0_i32_0 = arith.constant 0 : i32
    return %c0_i32 : i32
  }
  func.func @transform_2(%arg0: i32) -> (i32, i32) {
    %c0_i32 = arith.constant 0 : i32
    %c0_i32_0 = arith.constant 0 : i32
    return %c0_i32, %arg0 : i32, i32
  }
  func.func @transform_3(%arg0: i32) -> (i32, i32) {
    %c0_i32 = arith.constant 0 : i32
    %c0_i32_0 = arith.constant 0 : i32
    return %c0_i32, %arg0 : i32, i32
  }
}

</mosaic_0001>

<llo_original>
// kernel: tpu_custom_call.1
$region0: #{tpu_custom_call.1}
  #allocation0 [shape = 'u32[]', space=smem, size = 0x4, offset = 0x4, fixed_abs, tag = 'smem constant byte address 0x4 - core index']
  #allocation1 [shape = 'u32[144,128]{1,0:T(1,128)}', space=vmem, size = 0x12000, scoped, tag = 'internal scratch']
  #allocation2 [shape = 'f32[1]{0:T(128)S(6)}', space=smem, size = 0x200, scoped, tag = 'scoped memory for tpu_custom_call.1']
  %s0 = inlined_call_operand.vmem [shape: f32[8], index: 0, kind: input, shape index: {}]
  %s1 = inlined_call_operand.<no memory space> [shape: f32[1], index: 1, kind: input, shape index: {}]
  %s2 = inlined_call_operand.hbm [shape: f32[8,1024], index: 2, kind: input, shape index: {}]
  %s3 = inlined_call_operand.hbm [shape: f32[1,1024], index: 3, kind: output, shape index: {}]
  %s4 = sld [smem:[#allocation0]]
  $region53: #{tpu_custom_call.1} parent=0
    _
  %s6 = ssub.s32 1, %s4
  %s7 = scalar_select 0, %s6, %s4
  %8 = sst [smem:[#allocation2]] %s1
  $region1: #{tpu_custom_call.1} parent=0
    #allocation3 [shape = 'u8[512]{0}', space=smem, size = 0x200, scoped, tag = 'input window, operand 0, single buffered']
    #allocation4 [shape = 's32[2]{0}', space=sflag, size = 0x8, scoped, tag = 'scoped memory for tpu_custom_call.1']
    #allocation5 [shape = 's32[2]{0}', space=sflag, size = 0x8, scoped, tag = 'scoped memory for tpu_custom_call.1']
    #allocation6 [shape = 's32[2]{0}', space=sflag, size = 0x8, scoped, tag = 'scoped memory for tpu_custom_call.1']
    #allocation7 [shape = 'u8[32768]{0}', space=vmem, size = 0x8000, scoped, tag = 'input window, operand 2']
    #allocation8 [shape = 'u8[4096]{0}', space=vmem, size = 0x1000, scoped, tag = 'output window, operand 0']
    %9 = vsyncpa [#allocation6], 0
    %10 = vsyncpa [#allocation4], 0
    %s11 = scalar_lea.sflag [#allocation4], 1
    %12 = vsyncpa %s11, 0
    %13 = vsyncpa [#allocation5], 0
    %s14 = scalar_lea.sflag [#allocation5], 1
    %15 = vsyncpa %s14, 0
    loop: start=0, step=1, limit=4
    $region2: #{tpu_custom_call.1} parent=1 // loop_pre_header
      _
    $region3: #{tpu_custom_call.1} parent=1 // loop_header
      %s17 = sphi 0, %s21
      %p18 = scmp.ge.s32.totalorder %s17, 4
      %s25 = sphi 0, %s25
      %s27 = sphi 0, %s25
      %s28 = sphi 0, %s27
      %s42 = sphi 0, %s28
      %s46 = sphi 0, %s46
      %s48 = sphi 0, %s46
      %s49 = sphi 0, %s48
      %s63 = sphi 0, %s49
      %s69 = sphi 0, %s71
      %s72 = sphi 0, %s69
      %s73 = sphi 0, %s72
      %s89 = sphi 0, %s73
      %s95 = sphi 0, %s97
      %s98 = sphi 0, %s95
      %s99 = sphi 0, %s98
      %s115 = sphi 0, %s99
    $region4: #{tpu_custom_call.1} parent=1 // loop_header_branch
      %20 = sbr.rel (%p18) target = $region8
    $region5: #{tpu_custom_call.1} parent=1 // loop_body
      %s22 = ssub.s32 %s17, 1
      %s23 = ssub.s32 %s17, 2
      %s24 = sadd.s32 %s17, 1
      %s26 = sadd.s32 %s25, 1
      %p29 = scmp.eq.s32.totalorder %s17, 1
      %p30 = scmp.ne.s32.totalorder %s25, %s27
      %p31 = scmp.eq.s32.totalorder %s17, 0
      %p32 = por %p30, %p31
      %p33 = scmp.ne.s32.totalorder %s25, %s27
      %p34 = scmp.eq.s32.totalorder %s22, 1
      %p35 = por %p33, %p34
      %p36 = scmp.ne.s32.totalorder %s27, %s28
      %p37 = scmp.eq.s32.totalorder %s22, 0
      %p38 = por %p36, %p37
      %p39 = scmp.ne.s32.totalorder %s27, %s28
      %p40 = scmp.eq.s32.totalorder %s23, 1
      %p41 = por %p39, %p40
      %p43 = scmp.ne.s32.totalorder %s28, %s42
      %p44 = scmp.eq.s32.totalorder %s23, 0
      %p45 = por %p43, %p44
      %s47 = sadd.s32 %s46, 1
      %p50 = scmp.eq.s32.totalorder %s17, 1
      %p51 = scmp.ne.s32.totalorder %s46, %s48
      %p52 = scmp.eq.s32.totalorder %s17, 0
      %p53 = por %p51, %p52
      %p54 = scmp.ne.s32.totalorder %s46, %s48
      %p55 = scmp.eq.s32.totalorder %s22, 1
      %p56 = por %p54, %p55
      %p57 = scmp.ne.s32.totalorder %s48, %s49
      %p58 = scmp.eq.s32.totalorder %s22, 0
      %p59 = por %p57, %p58
      %p60 = scmp.ne.s32.totalorder %s48, %s49
      %p61 = scmp.eq.s32.totalorder %s23, 1
      %p62 = por %p60, %p61
      %p64 = scmp.ne.s32.totalorder %s49, %s63
      %p65 = scmp.eq.s32.totalorder %s23, 0
      %p66 = por %p64, %p65
      %s67 = ssub.s32 %s17, %s24
      %p68 = scmp.eq.s32.totalorder %s67, 0
      %s70 = sadd.s32 %s69, 1
      %s71 = scalar_select %p68, %s69, %s70
      %p74 = pneg %p68
      %p75 = scmp.eq.s32.totalorder %s17, 1
      %p76 = por %p74, %p75
      %p77 = scmp.ne.s32.totalorder %s69, %s72
      %p78 = scmp.eq.s32.totalorder %s17, 0
      %p79 = por %p77, %p78
      %p80 = scmp.ne.s32.totalorder %s69, %s72
      %p81 = scmp.eq.s32.totalorder %s22, 1
      %p82 = por %p80, %p81
      %p83 = scmp.ne.s32.totalorder %s72, %s73
      %p84 = scmp.eq.s32.totalorder %s22, 0
      %p85 = por %p83, %p84
      %p86 = scmp.ne.s32.totalorder %s72, %s73
      %p87 = scmp.eq.s32.totalorder %s23, 1
      %p88 = por %p86, %p87
      %p90 = scmp.ne.s32.totalorder %s73, %s89
      %p91 = scmp.eq.s32.totalorder %s23, 0
      %p92 = por %p90, %p91
      %s93 = ssub.s32 %s17, %s24
      %p94 = scmp.eq.s32.totalorder %s93, 0
      %s96 = sadd.s32 %s95, 1
      %s97 = scalar_select %p94, %s95, %s96
      %p100 = pneg %p94
      %p101 = scmp.eq.s32.totalorder %s17, 1
      %p102 = por %p100, %p101
      %p103 = scmp.ne.s32.totalorder %s95, %s98
      %p104 = scmp.eq.s32.totalorder %s17, 0
      %p105 = por %p103, %p104
      %p106 = scmp.ne.s32.totalorder %s95, %s98
      %p107 = scmp.eq.s32.totalorder %s22, 1
      %p108 = por %p106, %p107
      %p109 = scmp.ne.s32.totalorder %s98, %s99
      %p110 = scmp.eq.s32.totalorder %s22, 0
      %p111 = por %p109, %p110
      %p112 = scmp.ne.s32.totalorder %s98, %s99
      %p113 = scmp.eq.s32.totalorder %s23, 1
      %p114 = por %p112, %p113
      %p116 = scmp.ne.s32.totalorder %s99, %s115
      %p117 = scmp.eq.s32.totalorder %s23, 0
      %p118 = por %p116, %p117
      %p119 = scmp.le.s32.totalorder 1, %s17
      %p120 = scmp.lt.s32.totalorder %s17, 3
      %p121 = pnand %p119, %p120
      %p122 = pneg %p121
      // Predicated region
      $region9: #{tpu_custom_call.1} parent=5 // pred_check
        _
      $region10: #{tpu_custom_call.1} parent=5 // pred_check_branch
        %124 = sbr.rel (%p121) target = $region12
      $region11: #{tpu_custom_call.1} parent=5 // pred_region
        %s125 = ssub.s32 %s17, 1
        // Predicated region
        $region13: #{tpu_custom_call.1} parent=11 // pred_check
          %p126 = pneg %p38
        $region14: #{tpu_custom_call.1} parent=11 // pred_check_branch
          %128 = sbr.rel (%p126) target = $region16
        $region15: #{tpu_custom_call.1} parent=11 // pred_region
          %s130 = ssub.s32 16, 16
          %131 = vsyncadd [#allocation6], %s130
          %s133 = sshll.u32 %s0, 4
          %s134 = int_to_ptr.vmem [resolvable:$true] %s133
          %136 = dma.vmem_to_smem %s134, 16, [#allocation3], [#allocation6]
        $region16: #{tpu_custom_call.1} parent=11 // pred_fallthru
          _
        // Predicated region
        $region17: #{tpu_custom_call.1} parent=11 // pred_check
          %p137 = pneg %p59
        $region18: #{tpu_custom_call.1} parent=11 // pred_check_branch
          %139 = sbr.rel (%p137) target = $region20
        $region19: #{tpu_custom_call.1} parent=11 // pred_region
          _
        $region20: #{tpu_custom_call.1} parent=11 // pred_fallthru
          _
      $region12: #{tpu_custom_call.1} parent=5 // pred_fallthru
        _
      %p140 = scmp.lt.s32.totalorder %s17, 2
      // Predicated region
      $region21: #{tpu_custom_call.1} parent=5 // pred_check
        %p141 = pneg %p140
      $region22: #{tpu_custom_call.1} parent=5 // pred_check_branch
        %143 = sbr.rel (%p141) target = $region24
      $region23: #{tpu_custom_call.1} parent=5 // pred_region
        // Predicated region
        $region25: #{tpu_custom_call.1} parent=23 // pred_check
          %p144 = pneg %p79
        $region26: #{tpu_custom_call.1} parent=23 // pred_check_branch
          %146 = sbr.rel (%p144) target = $region28
        $region27: #{tpu_custom_call.1} parent=23 // pred_region
          %s147 = sand.u32 %s69, 1
          %s148 = scalar_lea.sflag [#allocation4], %s147
          %s149 = sand.u32 %s69, 1
          %s150 = smul.addr %s149, 32
          %s151 = scalar_lea.vmem [#allocation7], %s150
          %s152 = smul.u32 4, %s17
          %s154 = ssub.s32 512, 512
          %155 = vsyncadd %s148, %s154
          %s156 = smul.addr %s152, 128
          %s157 = scalar_lea.hbm %s2, %s156
          %s159 = sshll.u32 %s151, 4
          %s160 = int_to_ptr.vmem [resolvable:$true] %s159
          %162 = dma.hbm_to_vmem [thread:$0]  %s157, 512, %s160, %s148
        $region28: #{tpu_custom_call.1} parent=23 // pred_fallthru
          _
      $region24: #{tpu_custom_call.1} parent=5 // pred_fallthru
        _
      %p163 = scmp.le.s32.totalorder 1, %s17
      %p164 = scmp.lt.s32.totalorder %s17, 3
      %p165 = pnand %p163, %p164
      %p166 = pneg %p165
      // Predicated region
      $region29: #{tpu_custom_call.1} parent=5 // pred_check
        _
      $region30: #{tpu_custom_call.1} parent=5 // pred_check_branch
        %168 = sbr.rel (%p165) target = $region32
      $region31: #{tpu_custom_call.1} parent=5 // pred_region
        %s169 = ssub.s32 %s17, 1
        // Predicated region
        $region33: #{tpu_custom_call.1} parent=31 // pred_check
          %p170 = pneg %p38
        $region34: #{tpu_custom_call.1} parent=31 // pred_check_branch
          %172 = sbr.rel (%p170) target = $region36
        $region35: #{tpu_custom_call.1} parent=31 // pred_region
          %173 = dma.done [#allocation6], 16
        $region36: #{tpu_custom_call.1} parent=31 // pred_fallthru
          _
        %s174 = sand.u32 %s72, 1
        %s175 = scalar_lea.sflag [#allocation4], %s174
        %s176 = sand.u32 %s72, 1
        %s177 = smul.addr %s176, 32
        %s178 = scalar_lea.vmem [#allocation7], %s177
        // Predicated region
        $region37: #{tpu_custom_call.1} parent=31 // pred_check
          %p179 = pneg %p85
        $region38: #{tpu_custom_call.1} parent=31 // pred_check_branch
          %181 = sbr.rel (%p179) target = $region40
        $region39: #{tpu_custom_call.1} parent=31 // pred_region
          %182 = dma.done %s175, 512
        $region40: #{tpu_custom_call.1} parent=31 // pred_fallthru
          _
        %183 = sfence
        %p184 = pneg %p38
        %p185 = pneg %p35
        %p186 = pneg %p59
        %p187 = pneg %p56
        %s188 = sand.u32 %s72, 1
        %s189 = scalar_lea.sflag [#allocation4], %s188
        %s190 = sand.u32 %s72, 1
        %s191 = smul.addr %s190, 32
        %s192 = scalar_lea.vmem [#allocation7], %s191
        %p193 = pneg %p85
        %p194 = pneg %p82
        %p195 = pneg %p111
        %p196 = pneg %p108
        %s197 = sand.u32 %s98, 1
        %s198 = scalar_lea.sflag [#allocation5], %s197
        %s199 = sand.u32 %s98, 1
        %s200 = smul.addr %s199, 4
        %s201 = scalar_lea.vmem [#allocation8], %s200
        %s202 = smul.u32 4, %s22
        %s203 = smul.u32 4, %s22
        %v204 = vld [vmem:[%s178] ss:$8 sm:$0xf]
        %s205 = sld [smem:[#allocation3]]
        %v206 = vstv %s205
        %v207 = vmul.f32 %v204, %v206
        %s208 = scalar_lea.vmem %s178, 1 [#allocation7]
        %v209 = vld [vmem:[%s208] ss:$8 sm:$0xf]
        %s210 = sld [smem:[#allocation3 + $0x1]]
        %v211 = vstv %s210
        %v212 = vmul.f32 %v209, %v211
        %v213 = vadd.f32 %v207, %v212
        %s214 = scalar_lea.vmem %s178, 2 [#allocation7]
        %v215 = vld [vmem:[%s214] ss:$8 sm:$0xf]
        %s216 = sld [smem:[#allocation3 + $0x2]]
        %v217 = vstv %s216
        %v218 = vmul.f32 %v215, %v217
        %v219 = vadd.f32 %v213, %v218
        %s220 = scalar_lea.vmem %s178, 3 [#allocation7]
        %v221 = vld [vmem:[%s220] ss:$8 sm:$0xf]
        %s222 = sld [smem:[#allocation3 + $0x3]]
        %v223 = vstv %s222
        %v224 = vmul.f32 %v221, %v223
        %v225 = vadd.f32 %v219, %v224
        %s226 = scalar_lea.vmem %s178, 4 [#allocation7]
        %v227 = vld [vmem:[%s226] ss:$8 sm:$0xf]
        %s228 = sld [smem:[#allocation3 + $0x4]]
        %v229 = vstv %s228
        %v230 = vmul.f32 %v227, %v229
        %v231 = vadd.f32 %v225, %v230
        %s232 = scalar_lea.vmem %s178, 5 [#allocation7]
        %v233 = vld [vmem:[%s232] ss:$8 sm:$0xf]
        %s234 = sld [smem:[#allocation3 + $0x5]]
        %v235 = vstv %s234
        %v236 = vmul.f32 %v233, %v235
        %v237 = vadd.f32 %v231, %v236
        %s238 = scalar_lea.vmem %s178, 6 [#allocation7]
        %v239 = vld [vmem:[%s238] ss:$8 sm:$0xf]
        %s240 = sld [smem:[#allocation3 + $0x6]]
        %v241 = vstv %s240
        %v242 = vmul.f32 %v239, %v241
        %v243 = vadd.f32 %v237, %v242
        %s244 = scalar_lea.vmem %s178, 7 [#allocation7]
        %v245 = vld [vmem:[%s244] ss:$8 sm:$0xf]
        %s246 = sld [smem:[#allocation3 + $0x7]]
        %v247 = vstv %s246
        %v248 = vmul.f32 %v245, %v247
        %v249 = vadd.f32 %v243, %v248
        %s250 = sld [smem:[#allocation2]]
        %v251 = vstv %s250
        %v252 = vadd.f32 %v249, %v251
        %v253 = vlaneseq
        %vm254 = vcmp.ge.s32.totalorder %v253, 0
        %vm255 = vcmp.lt.s32.totalorder %v253, 512
        %vm256 = vmand %vm254, %vm255
        %257 = vst.msk [vmem:[%s201] sm:$0xf] %vm256, %v252
        %s258 = sand.u32 %s98, 1
        %s259 = scalar_lea.sflag [#allocation5], %s258
        %s260 = sand.u32 %s98, 1
        %s261 = smul.addr %s260, 4
        %s262 = scalar_lea.vmem [#allocation8], %s261
        // Predicated region
        $region41: #{tpu_custom_call.1} parent=31 // pred_check
          %p263 = pneg %p108
        $region42: #{tpu_custom_call.1} parent=31 // pred_check_branch
          %265 = sbr.rel (%p263) target = $region44
        $region43: #{tpu_custom_call.1} parent=31 // pred_region
          %s266 = smul.u32 4, %s22
          %s268 = ssub.s32 64, 64
          %269 = vsyncadd %s259, %s268
          %s270 = smul.addr %s266, 16
          %s271 = scalar_lea.hbm %s3, %s270
          %s273 = sshll.u32 %s262, 4
          %s274 = int_to_ptr.vmem [resolvable:$true] %s273
          %276 = dma.vmem_to_hbm [thread:$0]  %s274, 64, %s271, %s259
        $region44: #{tpu_custom_call.1} parent=31 // pred_fallthru
          _
      $region32: #{tpu_custom_call.1} parent=5 // pred_fallthru
        _
      %p277 = scmp.le.s32.totalorder 2, %s17
      // Predicated region
      $region45: #{tpu_custom_call.1} parent=5 // pred_check
        %p278 = pneg %p277
      $region46: #{tpu_custom_call.1} parent=5 // pred_check_branch
        %280 = sbr.rel (%p278) target = $region48
      $region47: #{tpu_custom_call.1} parent=5 // pred_region
        %s281 = ssub.s32 %s17, 2
        // Predicated region
        $region49: #{tpu_custom_call.1} parent=47 // pred_check
          %p282 = pneg %p114
        $region50: #{tpu_custom_call.1} parent=47 // pred_check_branch
          %284 = sbr.rel (%p282) target = $region52
        $region51: #{tpu_custom_call.1} parent=47 // pred_region
          %s285 = sand.u32 %s99, 1
          %s286 = scalar_lea.sflag [#allocation5], %s285
          %s287 = sand.u32 %s99, 1
          %s288 = smul.addr %s287, 4
          %s289 = scalar_lea.vmem [#allocation8], %s288
          %290 = dma.done %s286, 64
        $region52: #{tpu_custom_call.1} parent=47 // pred_fallthru
          _
      $region48: #{tpu_custom_call.1} parent=5 // pred_fallthru
        _
    $region6: #{tpu_custom_call.1} parent=1 // loop_footer
      %s21 = sadd.s32 1, %s17
    $region7: #{tpu_custom_call.1} parent=1 // loop_footer_branch
      %16 = sbr.rel target = $region3
    $region8: #{tpu_custom_call.1} parent=1 // loop_exit
      _
    %291 = vsyncpa [#allocation4], 1
    %s292 = scalar_lea.sflag [#allocation4], 1
    %293 = vsyncpa %s292, 1
    %294 = vsyncpa [#allocation5], 1
    %s295 = scalar_lea.sflag [#allocation5], 1
    %296 = vsyncpa %s295, 1
    %297 = vsyncpa [#allocation6], 1
    %s298 = scalar_lea.sflag [#allocation6], 1
    %299 = vsyncpa %s298, 1

</llo_original>
